<compile_context>
chip_gen: v7x
topology: tpu7x:2x2x1
jax: 0.10.0
libtpu: 0.0.40
codegen_flags: <defaults>
</compile_context>

<pallas_src>
import functools

import jax
import jax.numpy as jnp
from jax.experimental import pallas as pl
from jax.experimental.pallas import tpu as pltpu

LANE = 128


def _round_up(x, m=LANE):
    return ((x + m - 1) // m) * m


def _pad_to(x, rows, cols):
    r, c = x.shape
    if r == rows and c == cols:
        return x
    return jnp.pad(x, ((0, rows - r), (0, cols - c)))


def _fused_gcn_kernel(*refs, n_layers):
    """refs = [feat,
               (A_i, norm_i, W_i, b_i) * n_layers,
               A_out, norm_out, W_top, W_bot, b_out,
               o_ref]"""
    o_ref = refs[-1]
    h = refs[0][...]                          # (n0, F_pad) bf16
    idx = 1
    z_lin = None
    for i in range(n_layers):
        a_ref, norm_ref, w_ref, b_ref = refs[idx:idx + 4]
        idx += 4
        # copy_src + fn.sum  ==  dense block A @ H   (MXU, f32 accumulate)
        agg = jnp.dot(a_ref[...], h, preferred_element_type=jnp.float32)
        # NodeUpdate(test=True): per-destination norm, then Linear.
        agg = agg * norm_ref[...]
        z = jnp.dot(agg.astype(jnp.bfloat16), w_ref[...],
                    preferred_element_type=jnp.float32) + b_ref[...]
        if i == n_layers - 1:
            z_lin = z                         # feeds the implicit concat [z, relu(z)]
        else:
            h = jnp.maximum(z, 0.0).astype(jnp.bfloat16)

    # Output layer over the implicit concat, never materialized:
    #   A @ [z, relu(z)] = [A@z, A@relu(z)]   then split-weight linear.
    a_ref, norm_ref, wt_ref, wb_ref, b_ref = refs[idx:idx + 5]
    a = a_ref[...]
    agg_lin = jnp.dot(a, z_lin.astype(jnp.bfloat16),
                      preferred_element_type=jnp.float32)
    agg_act = jnp.dot(a, jnp.maximum(z_lin, 0.0).astype(jnp.bfloat16),
                      preferred_element_type=jnp.float32)
    out = (jnp.dot(agg_lin.astype(jnp.bfloat16), wt_ref[...],
                   preferred_element_type=jnp.float32)
           + jnp.dot(agg_act.astype(jnp.bfloat16), wb_ref[...],
                     preferred_element_type=jnp.float32))
    # norm is a per-dst-row scalar: (norm*X)@W == norm*(X@W); bias added last.
    o_ref[...] = out * norm_ref[...] + b_ref[...]


def gcn_infer_forward(features, blocks, norms, params, n_layers, n_classes):
    """Single fused pallas_call over all n_layers+1 GCN layers (lane-dense, bf16 MXU)."""
    assert len(blocks) == n_layers + 1 and len(norms) == n_layers + 1
    assert len(params) == n_layers + 1

    n_hidden = params[0][0].shape[1]
    f_pad = _round_up(features.shape[1])
    h_pad = _round_up(n_hidden)
    c_pad = _round_up(n_classes)

    inputs = []
    # Source-node features: pad lane dim to a 128 multiple, cast to bf16.
    inputs.append(_pad_to(features, features.shape[0], f_pad).astype(jnp.bfloat16))

    fan_pad = f_pad
    for i in range(n_layers):
        w, b = params[i]
        inputs.append(blocks[i].astype(jnp.bfloat16))        # block adjacency
        inputs.append(norms[i].astype(jnp.float32))           # (nd, 1) dst norms
        inputs.append(_pad_to(w, fan_pad, h_pad).astype(jnp.bfloat16))
        inputs.append(_pad_to(b, 1, h_pad).astype(jnp.float32))
        fan_pad = h_pad

    # Output layer: split W (2*n_hidden, n_classes) into top/bottom halves so the
    # concat is consumed without ever being materialized.
    w_out, b_out = params[n_layers]
    w_top, w_bot = w_out[:n_hidden], w_out[n_hidden:]
    inputs.append(blocks[n_layers].astype(jnp.bfloat16))
    inputs.append(norms[n_layers].astype(jnp.float32))
    inputs.append(_pad_to(w_top, h_pad, c_pad).astype(jnp.bfloat16))
    inputs.append(_pad_to(w_bot, h_pad, c_pad).astype(jnp.bfloat16))
    inputs.append(_pad_to(b_out, 1, c_pad).astype(jnp.float32))

    nd_out = blocks[n_layers].shape[0]
    out_padded = pl.pallas_call(
        functools.partial(_fused_gcn_kernel, n_layers=n_layers),
        out_shape=jax.ShapeDtypeStruct((nd_out, c_pad), jnp.float32),
        in_specs=[pl.BlockSpec(memory_space=pltpu.MemorySpace.VMEM)
                  for _ in inputs],
        out_specs=pl.BlockSpec(memory_space=pltpu.MemorySpace.VMEM),
    )(*inputs)
    return out_padded[:, :n_classes]


def _init_linear(key, in_feats, out_feats):
    # Deterministic init mimicking nn.Linear's uniform(-1/sqrt(fan_in), 1/sqrt(fan_in)).
    kw, kb = jax.random.split(key)
    bound = 1.0 / (in_feats ** 0.5)
    w = jax.random.uniform(kw, (in_feats, out_feats), jnp.float32, -bound, bound)
    b = jax.random.uniform(kb, (1, out_feats), jnp.float32, -bound, bound)
    return w, b


class GCNInferPallas:
    """Mirrors GCNInfer.__init__ layer structure (n_layers hidden + 1 output layer)."""

    def __init__(self, key, in_feats, n_hidden, n_classes, n_layers):
        self.n_layers = n_layers
        self.n_classes = n_classes
        keys = jax.random.split(key, n_layers + 1)
        self.params = []
        self.params.append(_init_linear(keys[0], in_feats, n_hidden))
        for i in range(1, n_layers):
            self.params.append(_init_linear(keys[i], n_hidden, n_hidden))
        # Output layer consumes concat(h, relu(h)) of the last hidden layer.
        self.params.append(_init_linear(keys[n_layers], 2 * n_hidden, n_classes))

    def __call__(self, features, blocks, norms):
        return gcn_infer_forward(features, blocks, norms, self.params,
                                 self.n_layers, self.n_classes)

    def reference(self, features, blocks, norms):
        """Pure f32 JAX reference mirroring GCNInfer.forward."""
        h = features
        for i in range(self.n_layers):
            w, b = self.params[i]
            z = (blocks[i] @ h) * norms[i]
            z = z @ w + b
            if i == self.n_layers - 1:
                h = jnp.concatenate([z, jnp.maximum(z, 0.0)], axis=1)
            else:
                h = jnp.maximum(z, 0.0)
        w, b = self.params[self.n_layers]
        z = (blocks[self.n_layers] @ h) * norms[self.n_layers]
        return z @ w + b


if __name__ == "__main__":
    key = jax.random.PRNGKey(0)
    k_param, k_feat, k_a0, k_a1, k_a2 = jax.random.split(key, 5)

    in_feats, n_hidden, n_classes, n_layers = 32, 32, 16, 2
    # NodeFlow layer node counts (multiples of 16 keep bf16 sublane tiles dense):
    # [src of block0, src of block1, src of block2, dst of block2]
    layer_sizes = [64, 32, 16, 16]

    features = jax.random.normal(k_feat, (layer_sizes[0], in_feats), jnp.float32)

    blocks, norms = [], []
    for kk, nd, ns in [(k_a0, layer_sizes[1], layer_sizes[0]),
                       (k_a1, layer_sizes[2], layer_sizes[1]),
                       (k_a2, layer_sizes[3], layer_sizes[2])]:
        a = jax.random.bernoulli(kk, 0.5, (nd, ns)).astype(jnp.float32)
        deg = jnp.maximum(a.sum(axis=1, keepdims=True), 1.0)
        blocks.append(a)
        norms.append(1.0 / deg)  # per-destination norm, as stored in node.data['norm']

    model = GCNInferPallas(k_param, in_feats, n_hidden, n_classes, n_layers)

    out = jax.block_until_ready(model(features, blocks, norms))
    ref = model.reference(features, blocks, norms)

    assert out.shape == (layer_sizes[-1], n_classes)
    # bf16 MXU operands with f32 accumulation vs. an all-f32 reference -> loosened tol.
    assert jnp.allclose(out, ref, atol=2e-2, rtol=2e-2), \
        float(jnp.max(jnp.abs(out - ref)))

    print("KERNEL_OK")
</pallas_src>

<mosaic_0001>
module attributes {stable_mosaic.version = 11 : i64} {
  func.func @_fused_gcn_kernel(%arg0: memref<64x128xbf16, #tpu.memory_space<vmem>>, %arg1: memref<32x64xbf16, #tpu.memory_space<vmem>>, %arg2: memref<32x1xf32, #tpu.memory_space<vmem>>, %arg3: memref<128x128xbf16, #tpu.memory_space<vmem>>, %arg4: memref<1x128xf32, #tpu.memory_space<vmem>>, %arg5: memref<16x32xbf16, #tpu.memory_space<vmem>>, %arg6: memref<16x1xf32, #tpu.memory_space<vmem>>, %arg7: memref<128x128xbf16, #tpu.memory_space<vmem>>, %arg8: memref<1x128xf32, #tpu.memory_space<vmem>>, %arg9: memref<16x16xbf16, #tpu.memory_space<vmem>>, %arg10: memref<16x1xf32, #tpu.memory_space<vmem>>, %arg11: memref<128x128xbf16, #tpu.memory_space<vmem>>, %arg12: memref<128x128xbf16, #tpu.memory_space<vmem>>, %arg13: memref<1x128xf32, #tpu.memory_space<vmem>>, %arg14: memref<16x128xf32, #tpu.memory_space<vmem>>) attributes {dimension_semantics = [], scalar_prefetch = 0 : i64, scratch_operands = 0 : i64, tpu.core_type = #tpu.core_type<tc>} {
    %c0 = arith.constant 0 : index
    %c0_0 = arith.constant 0 : index
    %0 = vector.load %arg0[%c0, %c0_0] : memref<64x128xbf16, #tpu.memory_space<vmem>>, vector<64x128xbf16>
    %c0_1 = arith.constant 0 : index
    %c0_2 = arith.constant 0 : index
    %1 = vector.load %arg1[%c0_1, %c0_2] : memref<32x64xbf16, #tpu.memory_space<vmem>>, vector<32x64xbf16>
    %cst = arith.constant dense<0.000000e+00> : vector<32x128xf32>
    %2 = tpu.matmul %1, %0, %cst {dimension_numbers = #tpu.dot_dimension_numbers<[1], [0], [0], [1], [0, 0, 1, 1], [], []>} : vector<32x64xbf16>, vector<64x128xbf16>, vector<32x128xf32> -> vector<32x128xf32>
    %c0_3 = arith.constant 0 : index
    %c0_4 = arith.constant 0 : index
    %3 = vector.load %arg2[%c0_3, %c0_4] : memref<32x1xf32, #tpu.memory_space<vmem>>, vector<32x1xf32>
    %4 = vector.broadcast %3 : vector<32x1xf32> to vector<32x128xf32>
    %5 = arith.mulf %2, %4 : vector<32x128xf32>
    %6 = arith.truncf %5 : vector<32x128xf32> to vector<32x128xbf16>
    %c0_5 = arith.constant 0 : index
    %c0_6 = arith.constant 0 : index
    %7 = vector.load %arg3[%c0_5, %c0_6] : memref<128x128xbf16, #tpu.memory_space<vmem>>, vector<128x128xbf16>
    %cst_7 = arith.constant dense<0.000000e+00> : vector<32x128xf32>
    %8 = tpu.matmul %6, %7, %cst_7 {dimension_numbers = #tpu.dot_dimension_numbers<[1], [0], [0], [1], [0, 0, 1, 1], [], []>} : vector<32x128xbf16>, vector<128x128xbf16>, vector<32x128xf32> -> vector<32x128xf32>
    %c0_8 = arith.constant 0 : index
    %c0_9 = arith.constant 0 : index
    %9 = vector.load %arg4[%c0_8, %c0_9] : memref<1x128xf32, #tpu.memory_space<vmem>>, vector<1x128xf32>
    %10 = vector.broadcast %9 : vector<1x128xf32> to vector<32x128xf32>
    %11 = arith.addf %8, %10 : vector<32x128xf32>
    %cst_10 = arith.constant 0.000000e+00 : f32
    %12 = vector.broadcast %cst_10 : f32 to vector<32x128xf32>
    %13 = arith.maximumf %11, %12 : vector<32x128xf32>
    %14 = arith.truncf %13 : vector<32x128xf32> to vector<32x128xbf16>
    %c0_11 = arith.constant 0 : index
    %c0_12 = arith.constant 0 : index
    %15 = vector.load %arg5[%c0_11, %c0_12] : memref<16x32xbf16, #tpu.memory_space<vmem>>, vector<16x32xbf16>
    %cst_13 = arith.constant dense<0.000000e+00> : vector<16x128xf32>
    %16 = tpu.matmul %15, %14, %cst_13 {dimension_numbers = #tpu.dot_dimension_numbers<[1], [0], [0], [1], [0, 0, 1, 1], [], []>} : vector<16x32xbf16>, vector<32x128xbf16>, vector<16x128xf32> -> vector<16x128xf32>
    %c0_14 = arith.constant 0 : index
    %c0_15 = arith.constant 0 : index
    %17 = vector.load %arg6[%c0_14, %c0_15] : memref<16x1xf32, #tpu.memory_space<vmem>>, vector<16x1xf32>
    %18 = vector.broadcast %17 : vector<16x1xf32> to vector<16x128xf32>
    %19 = arith.mulf %16, %18 : vector<16x128xf32>
    %20 = arith.truncf %19 : vector<16x128xf32> to vector<16x128xbf16>
    %c0_16 = arith.constant 0 : index
    %c0_17 = arith.constant 0 : index
    %21 = vector.load %arg7[%c0_16, %c0_17] : memref<128x128xbf16, #tpu.memory_space<vmem>>, vector<128x128xbf16>
    %cst_18 = arith.constant dense<0.000000e+00> : vector<16x128xf32>
    %22 = tpu.matmul %20, %21, %cst_18 {dimension_numbers = #tpu.dot_dimension_numbers<[1], [0], [0], [1], [0, 0, 1, 1], [], []>} : vector<16x128xbf16>, vector<128x128xbf16>, vector<16x128xf32> -> vector<16x128xf32>
    %c0_19 = arith.constant 0 : index
    %c0_20 = arith.constant 0 : index
    %23 = vector.load %arg8[%c0_19, %c0_20] : memref<1x128xf32, #tpu.memory_space<vmem>>, vector<1x128xf32>
    %24 = vector.broadcast %23 : vector<1x128xf32> to vector<16x128xf32>
    %25 = arith.addf %22, %24 : vector<16x128xf32>
    %c0_21 = arith.constant 0 : index
    %c0_22 = arith.constant 0 : index
    %26 = vector.load %arg9[%c0_21, %c0_22] : memref<16x16xbf16, #tpu.memory_space<vmem>>, vector<16x16xbf16>
    %27 = arith.truncf %25 : vector<16x128xf32> to vector<16x128xbf16>
    %cst_23 = arith.constant dense<0.000000e+00> : vector<16x128xf32>
    %28 = tpu.matmul %26, %27, %cst_23 {dimension_numbers = #tpu.dot_dimension_numbers<[1], [0], [0], [1], [0, 0, 1, 1], [], []>} : vector<16x16xbf16>, vector<16x128xbf16>, vector<16x128xf32> -> vector<16x128xf32>
    %cst_24 = arith.constant 0.000000e+00 : f32
    %29 = vector.broadcast %cst_24 : f32 to vector<16x128xf32>
    %30 = arith.maximumf %25, %29 : vector<16x128xf32>
    %31 = arith.truncf %30 : vector<16x128xf32> to vector<16x128xbf16>
    %cst_25 = arith.constant dense<0.000000e+00> : vector<16x128xf32>
    %32 = tpu.matmul %26, %31, %cst_25 {dimension_numbers = #tpu.dot_dimension_numbers<[1], [0], [0], [1], [0, 0, 1, 1], [], []>} : vector<16x16xbf16>, vector<16x128xbf16>, vector<16x128xf32> -> vector<16x128xf32>
    %33 = arith.truncf %28 : vector<16x128xf32> to vector<16x128xbf16>
    %c0_26 = arith.constant 0 : index
    %c0_27 = arith.constant 0 : index
    %34 = vector.load %arg11[%c0_26, %c0_27] : memref<128x128xbf16, #tpu.memory_space<vmem>>, vector<128x128xbf16>
    %cst_28 = arith.constant dense<0.000000e+00> : vector<16x128xf32>
    %35 = tpu.matmul %33, %34, %cst_28 {dimension_numbers = #tpu.dot_dimension_numbers<[1], [0], [0], [1], [0, 0, 1, 1], [], []>} : vector<16x128xbf16>, vector<128x128xbf16>, vector<16x128xf32> -> vector<16x128xf32>
    %36 = arith.truncf %32 : vector<16x128xf32> to vector<16x128xbf16>
    %c0_29 = arith.constant 0 : index
    %c0_30 = arith.constant 0 : index
    %37 = vector.load %arg12[%c0_29, %c0_30] : memref<128x128xbf16, #tpu.memory_space<vmem>>, vector<128x128xbf16>
    %cst_31 = arith.constant dense<0.000000e+00> : vector<16x128xf32>
    %38 = tpu.matmul %36, %37, %cst_31 {dimension_numbers = #tpu.dot_dimension_numbers<[1], [0], [0], [1], [0, 0, 1, 1], [], []>} : vector<16x128xbf16>, vector<128x128xbf16>, vector<16x128xf32> -> vector<16x128xf32>
    %39 = arith.addf %35, %38 : vector<16x128xf32>
    %c0_32 = arith.constant 0 : index
    %c0_33 = arith.constant 0 : index
    %40 = vector.load %arg10[%c0_32, %c0_33] : memref<16x1xf32, #tpu.memory_space<vmem>>, vector<16x1xf32>
    %41 = vector.broadcast %40 : vector<16x1xf32> to vector<16x128xf32>
    %42 = arith.mulf %39, %41 : vector<16x128xf32>
    %c0_34 = arith.constant 0 : index
    %c0_35 = arith.constant 0 : index
    %43 = vector.load %arg13[%c0_34, %c0_35] : memref<1x128xf32, #tpu.memory_space<vmem>>, vector<1x128xf32>
    %44 = vector.broadcast %43 : vector<1x128xf32> to vector<16x128xf32>
    %45 = arith.addf %42, %44 : vector<16x128xf32>
    %c0_36 = arith.constant 0 : index
    %c0_37 = arith.constant 0 : index
    %46 = vector.load %arg14[%c0_36, %c0_37] : memref<16x128xf32, #tpu.memory_space<vmem>>, vector<16x128xf32>
    tpu.vector_store %arg14[%c0_36, %c0_37], %45 {strides = array<i32>} : memref<16x128xf32, #tpu.memory_space<vmem>>, vector<16x128xf32>,
    return
  }
}

</mosaic_0001>

<llo_original>
// kernel: tpu_custom_call.1
$region0: #{tpu_custom_call.1}
  #allocation0 [shape = 'u32[]', space=smem, size = 0x4, offset = 0x4, fixed_abs, tag = 'smem constant byte address 0x4 - core index']
  #allocation1 [shape = 'u32[144,128]{1,0:T(1,128)}', space=vmem, size = 0x12000, scoped, tag = 'internal scratch']
  %s0 = inlined_call_operand.hbm [shape: bf16[64,128], index: 0, kind: input, shape index: {}]
  %s1 = inlined_call_operand.hbm [shape: bf16[32,64], index: 1, kind: input, shape index: {}]
  %s2 = inlined_call_operand.vmem [shape: f32[32,1], index: 2, kind: input, shape index: {}]
  %s3 = inlined_call_operand.vmem [shape: bf16[128,128], index: 3, kind: input, shape index: {}]
  %s4 = inlined_call_operand.vmem [shape: f32[1,128], index: 4, kind: input, shape index: {}]
  %s5 = inlined_call_operand.vmem [shape: bf16[16,32], index: 5, kind: input, shape index: {}]
  %s6 = inlined_call_operand.vmem [shape: f32[16,1], index: 6, kind: input, shape index: {}]
  %s7 = inlined_call_operand.hbm [shape: bf16[128,128], index: 7, kind: input, shape index: {}]
  %s8 = inlined_call_operand.vmem [shape: f32[1,128], index: 8, kind: input, shape index: {}]
  %s9 = inlined_call_operand.vmem [shape: bf16[16,16], index: 9, kind: input, shape index: {}]
  %s10 = inlined_call_operand.vmem [shape: f32[16,1], index: 10, kind: input, shape index: {}]
  %s11 = inlined_call_operand.hbm [shape: bf16[128,128], index: 11, kind: input, shape index: {}]
  %s12 = inlined_call_operand.hbm [shape: bf16[128,128], index: 12, kind: input, shape index: {}]
  %s13 = inlined_call_operand.vmem [shape: f32[1,128], index: 13, kind: input, shape index: {}]
  %s14 = inlined_call_operand.hbm [shape: f32[16,128], index: 14, kind: output, shape index: {}]
  %s15 = sld [smem:[#allocation0]]
  $region86: #{tpu_custom_call.1} parent=0
    _
  %s17 = ssub.s32 1, %s15
  %s18 = scalar_select 0, %s17, %s15
  $region1: #{tpu_custom_call.1} parent=0
    #allocation2 [shape = 'u8[16384]{0}', space=vmem, size = 0x4000, scoped, tag = 'input window, operand 0, single buffered']
    #allocation3 [shape = 's32[1]{0}', space=sflag, size = 0x4, scoped, tag = 'scoped memory for tpu_custom_call.1']
    #allocation4 [shape = 's32[1]{0}', space=sflag, size = 0x4, scoped, tag = 'scoped memory for tpu_custom_call.1']
    #allocation5 [shape = 'u8[8192]{0}', space=vmem, size = 0x2000, scoped, tag = 'input window, operand 1, single buffered']
    #allocation6 [shape = 's32[1]{0}', space=sflag, size = 0x4, scoped, tag = 'scoped memory for tpu_custom_call.1']
    #allocation7 [shape = 'u8[32768]{0}', space=vmem, size = 0x8000, scoped, tag = 'input window, operand 7, single buffered']
    #allocation8 [shape = 'u8[32768]{0}', space=vmem, size = 0x8000, scoped, tag = 'input window, operand 11, single buffered']
    #allocation9 [shape = 's32[1]{0}', space=sflag, size = 0x4, scoped, tag = 'scoped memory for tpu_custom_call.1']
    #allocation10 [shape = 'u8[32768]{0}', space=vmem, size = 0x8000, scoped, tag = 'input window, operand 12, single buffered']
    #allocation11 [shape = 'u8[8192]{0}', space=vmem, size = 0x2000, scoped, tag = 'output window, operand 0, single buffered']
    %19 = vsyncpa [#allocation3], 0
    %20 = vsyncpa [#allocation6], 0
    %21 = vsyncpa [#allocation9], 0
    %22 = vsyncpa [#allocation4], 0
    // Predicated region
    $region2: #{tpu_custom_call.1} parent=1 // pred_check
      _
    $region3: #{tpu_custom_call.1} parent=1 // pred_check_branch
      %24 = sbr.rel (0) target = $region5
    $region4: #{tpu_custom_call.1} parent=1 // pred_region
      %s26 = ssub.s32 512, 512
      %27 = vsyncadd [#allocation3], %s26
      %s28 = sshll.u32 [#allocation2], 4
      %s29 = int_to_ptr.vmem [resolvable:$true] %s28
      %34 = dma.hbm_to_vmem [thread:$0]  %s0, 512, %s29, [#allocation3], 64, 64, 4
    $region5: #{tpu_custom_call.1} parent=1 // pred_fallthru
      _
    // Predicated region
    $region6: #{tpu_custom_call.1} parent=1 // pred_check
      _
    $region7: #{tpu_custom_call.1} parent=1 // pred_check_branch
      %36 = sbr.rel (0) target = $region9
    $region8: #{tpu_custom_call.1} parent=1 // pred_region
      %s38 = ssub.s32 256, 256
      %39 = vsyncadd [#allocation6], %s38
      %s40 = sshll.u32 [#allocation5], 4
      %s41 = int_to_ptr.vmem [resolvable:$true] %s40
      %46 = dma.hbm_to_vmem [thread:$0]  %s1, 256, %s41, [#allocation6], 64, 64, 4
    $region9: #{tpu_custom_call.1} parent=1 // pred_fallthru
      _
    // Predicated region
    $region10: #{tpu_custom_call.1} parent=1 // pred_check
      _
    $region11: #{tpu_custom_call.1} parent=1 // pred_check_branch
      %48 = sbr.rel (0) target = $region13
    $region12: #{tpu_custom_call.1} parent=1 // pred_region
      _
    $region13: #{tpu_custom_call.1} parent=1 // pred_fallthru
      _
    // Predicated region
    $region14: #{tpu_custom_call.1} parent=1 // pred_check
      _
    $region15: #{tpu_custom_call.1} parent=1 // pred_check_branch
      %50 = sbr.rel (0) target = $region17
    $region16: #{tpu_custom_call.1} parent=1 // pred_region
      _
    $region17: #{tpu_custom_call.1} parent=1 // pred_fallthru
      _
    // Predicated region
    $region18: #{tpu_custom_call.1} parent=1 // pred_check
      _
    $region19: #{tpu_custom_call.1} parent=1 // pred_check_branch
      %52 = sbr.rel (0) target = $region21
    $region20: #{tpu_custom_call.1} parent=1 // pred_region
      _
    $region21: #{tpu_custom_call.1} parent=1 // pred_fallthru
      _
    // Predicated region
    $region22: #{tpu_custom_call.1} parent=1 // pred_check
      _
    $region23: #{tpu_custom_call.1} parent=1 // pred_check_branch
      %54 = sbr.rel (0) target = $region25
    $region24: #{tpu_custom_call.1} parent=1 // pred_region
      _
    $region25: #{tpu_custom_call.1} parent=1 // pred_fallthru
      _
    // Predicated region
    $region26: #{tpu_custom_call.1} parent=1 // pred_check
      _
    $region27: #{tpu_custom_call.1} parent=1 // pred_check_branch
      %56 = sbr.rel (0) target = $region29
    $region28: #{tpu_custom_call.1} parent=1 // pred_region
      _
    $region29: #{tpu_custom_call.1} parent=1 // pred_fallthru
      _
    // Predicated region
    $region30: #{tpu_custom_call.1} parent=1 // pred_check
      _
    $region31: #{tpu_custom_call.1} parent=1 // pred_check_branch
      %58 = sbr.rel (0) target = $region33
    $region32: #{tpu_custom_call.1} parent=1 // pred_region
      %s60 = ssub.s32 1024, 1024
      %61 = vsyncadd [#allocation6], %s60
      %s62 = sshll.u32 [#allocation7], 4
      %s63 = int_to_ptr.vmem [resolvable:$true] %s62
      %68 = dma.hbm_to_vmem [thread:$0]  %s7, 1024, %s63, [#allocation6], 64, 64, 4
    $region33: #{tpu_custom_call.1} parent=1 // pred_fallthru
      _
    // Predicated region
    $region34: #{tpu_custom_call.1} parent=1 // pred_check
      _
    $region35: #{tpu_custom_call.1} parent=1 // pred_check_branch
      %70 = sbr.rel (0) target = $region37
    $region36: #{tpu_custom_call.1} parent=1 // pred_region
      _
    $region37: #{tpu_custom_call.1} parent=1 // pred_fallthru
      _
    // Predicated region
    $region38: #{tpu_custom_call.1} parent=1 // pred_check
      _
    $region39: #{tpu_custom_call.1} parent=1 // pred_check_branch
      %72 = sbr.rel (0) target = $region41
    $region40: #{tpu_custom_call.1} parent=1 // pred_region
      _
    $region41: #{tpu_custom_call.1} parent=1 // pred_fallthru
      _
    // Predicated region
    $region42: #{tpu_custom_call.1} parent=1 // pred_check
      _
    $region43: #{tpu_custom_call.1} parent=1 // pred_check_branch
      %74 = sbr.rel (0) target = $region45
    $region44: #{tpu_custom_call.1} parent=1 // pred_region
      _
    $region45: #{tpu_custom_call.1} parent=1 // pred_fallthru
      _
    // Predicated region
    $region46: #{tpu_custom_call.1} parent=1 // pred_check
      _
    $region47: #{tpu_custom_call.1} parent=1 // pred_check_branch
      %76 = sbr.rel (0) target = $region49
    $region48: #{tpu_custom_call.1} parent=1 // pred_region
      %s78 = ssub.s32 1024, 1024
      %79 = vsyncadd [#allocation9], %s78
      %s80 = sshll.u32 [#allocation8], 4
      %s81 = int_to_ptr.vmem [resolvable:$true] %s80
      %86 = dma.hbm_to_vmem [thread:$0]  %s11, 1024, %s81, [#allocation9], 64, 64, 4
    $region49: #{tpu_custom_call.1} parent=1 // pred_fallthru
      _
    // Predicated region
    $region50: #{tpu_custom_call.1} parent=1 // pred_check
      _
    $region51: #{tpu_custom_call.1} parent=1 // pred_check_branch
      %88 = sbr.rel (0) target = $region53
    $region52: #{tpu_custom_call.1} parent=1 // pred_region
      %s90 = ssub.s32 1024, 1024
      %91 = vsyncadd [#allocation9], %s90
      %s92 = sshll.u32 [#allocation10], 4
      %s93 = int_to_ptr.vmem [resolvable:$true] %s92
      %98 = dma.hbm_to_vmem [thread:$0]  %s12, 1024, %s93, [#allocation9], 64, 64, 4
    $region53: #{tpu_custom_call.1} parent=1 // pred_fallthru
      _
    // Predicated region
    $region54: #{tpu_custom_call.1} parent=1 // pred_check
      _
    $region55: #{tpu_custom_call.1} parent=1 // pred_check_branch
      %100 = sbr.rel (0) target = $region57
    $region56: #{tpu_custom_call.1} parent=1 // pred_region
      _
    $region57: #{tpu_custom_call.1} parent=1 // pred_fallthru
      _
    // Predicated region
    $region58: #{tpu_custom_call.1} parent=1 // pred_check
      _
    $region59: #{tpu_custom_call.1} parent=1 // pred_check_branch
      %102 = sbr.rel (0) target = $region61
    $region60: #{tpu_custom_call.1} parent=1 // pred_region
      %103 = dma.done [#allocation3], 512
    $region61: #{tpu_custom_call.1} parent=1 // pred_fallthru
      _
    // Predicated region
    $region62: #{tpu_custom_call.1} parent=1 // pred_check
      _
    $region63: #{tpu_custom_call.1} parent=1 // pred_check_branch
      %105 = sbr.rel (0) target = $region65
    $region64: #{tpu_custom_call.1} parent=1 // pred_region
      %106 = dma.done [#allocation6], 256
    $region65: #{tpu_custom_call.1} parent=1 // pred_fallthru
      _
    // Predicated region
    $region66: #{tpu_custom_call.1} parent=1 // pred_check
      _
    $region67: #{tpu_custom_call.1} parent=1 // pred_check_branch
      %108 = sbr.rel (0) target = $region69
    $region68: #{tpu_custom_call.1} parent=1 // pred_region
      %109 = dma.done [#allocation6], 1024
    $region69: #{tpu_custom_call.1} parent=1 // pred_fallthru
      _
    // Predicated region
    $region70: #{tpu_custom_call.1} parent=1 // pred_check
      _
    $region71: #{tpu_custom_call.1} parent=1 // pred_check_branch
      %111 = sbr.rel (0) target = $region73
    $region72: #{tpu_custom_call.1} parent=1 // pred_region
      %112 = dma.done [#allocation9], 1024
    $region73: #{tpu_custom_call.1} parent=1 // pred_fallthru
      _
    // Predicated region
    $region74: #{tpu_custom_call.1} parent=1 // pred_check
      _
    $region75: #{tpu_custom_call.1} parent=1 // pred_check_branch
      %114 = sbr.rel (0) target = $region77
    $region76: #{tpu_custom_call.1} parent=1 // pred_region
      %115 = dma.done [#allocation9], 1024
    $region77: #{tpu_custom_call.1} parent=1 // pred_fallthru
      _
    %v117 = vld [vmem:[#allocation2] sm:$0xf]
    %v118 = vld [vmem:[#allocation2 + $0x4] sm:$0xf]
    %v119 = vld [vmem:[#allocation2 + $0x8] sm:$0xf]
    %v120 = vld [vmem:[#allocation2 + $0xc] sm:$0xf]
    %v121 = vld [vmem:[#allocation2 + $0x10] sm:$0xf]
    %v122 = vld [vmem:[#allocation2 + $0x14] sm:$0xf]
    %v123 = vld [vmem:[#allocation2 + $0x18] sm:$0xf]
    %v124 = vld [vmem:[#allocation2 + $0x1c] sm:$0xf]
    %v125 = vld [vmem:[#allocation5] sm:$0xf]
    %v126 = vld [vmem:[#allocation5 + $0x4] sm:$0xf]
    %v127 = vld [vmem:[#allocation5 + $0x8] sm:$0xf]
    %v128 = vld [vmem:[#allocation5 + $0xc] sm:$0xf]
    %v133 = vunpack.c.l.b16 %v125
    %v134 = vunpack.c.l.b16 %v126
    %v135 = vunpack.c.l.b16 %v127
    %v136 = vunpack.c.l.b16 %v128
    %v137 = vpack.c.b16 %v134, %v133
    %v138 = vpack.c.b16 %v136, %v135
    %v147 = vunpack.c.l.b16 %v117
    %v148 = vunpack.c.l.b16 %v118
    %v149 = vunpack.c.l.b16 %v119
    %v150 = vunpack.c.l.b16 %v120
    %v151 = vunpack.c.l.b16 %v121
    %v152 = vunpack.c.l.b16 %v122
    %v153 = vunpack.c.l.b16 %v123
    %v154 = vunpack.c.l.b16 %v124
    %v155 = vpack.c.b16 %v148, %v147
    %v156 = vpack.c.b16 %v150, %v149
    %v157 = vpack.c.b16 %v152, %v151
    %v158 = vpack.c.b16 %v154, %v153
    %vm163 = vcmask 523264
    %v165 = vsel %vm163, %v137, 0
    %v168 = vsel %vm163, %v138, 0
    %170 = vmatprep.subr.bf16.mxu0 0
    %171 = vmatpush1.bf16.msra.mxu0 %v155
    %172 = vmatprep.subr.bf16.mxu0 0
    %173 = vmatpush1.bf16.msra.mxu0 %v156
    %174 = vmatprep.subr.bf16.mxu0 0
    %175 = vmatpush1.bf16.msra.mxu0 %v157
    %176 = vmatprep.subr.bf16.mxu0 0
    %177 = vmatpush1.bf16.msra.mxu0 %v158
    %178 = vmatprep.subr.bf16.mxu0 0
    %179 = vmatpush1.bf16.msra.mxu0 0
    %180 = vmatprep.subr.bf16.mxu0 0
    %181 = vmatpush1.bf16.msra.mxu0 0
    %182 = vmatprep.subr.bf16.mxu0 0
    %183 = vmatpush1.bf16.msra.mxu0 0
    %184 = vmatprep.subr.bf16.mxu0 0
    %185 = vmatpush1.bf16.msra.mxu0 0
    %186 = vmatprep.subr.bf16.mxu0 0
    %187 = vmatpush1.bf16.msra.mxu0 0
    %188 = vmatprep.subr.bf16.mxu0 0
    %189 = vmatpush1.bf16.msra.mxu0 0
    %190 = vmatprep.subr.bf16.mxu0 0
    %191 = vmatpush1.bf16.msra.mxu0 0
    %192 = vmatprep.subr.bf16.mxu0 0
    %193 = vmatpush1.bf16.msra.mxu0 0
    %194 = vmatprep.subr.bf16.mxu0 0
    %195 = vmatpush1.bf16.msra.mxu0 0
    %196 = vmatprep.subr.bf16.mxu0 0
    %197 = vmatpush1.bf16.msra.mxu0 0
    %198 = vmatprep.subr.bf16.mxu0 0
    %199 = vmatpush1.bf16.msra.mxu0 0
    %200 = vmatprep.subr.bf16.mxu0 0
    %201 = vmatpush1.bf16.msra.mxu0 0
    %202 = vmatprep.mubr.bf16.mxu0 0
    %203 = vmatmul.mubr.bf16.gmra.mrb[0].mxu0 %v165
    %v204 = vpop.f32.mrb[0].mxu0
    %v205 = vadd.f32 0.0, %v204
    %v206 = vpop.f32.mrb[0].mxu0
    %v207 = vpop.f32.mrb[0].mxu0
    %v208 = vadd.f32 0.0, %v207
    %v209 = vpop.f32.mrb[0].mxu0
    %210 = vmatprep.mubr.bf16.mxu0 0
    %211 = vmatmul.mubr.bf16.gmra.mrb[0].mxu0 %v168
    %v212 = vpop.f32.mrb[0].mxu0
    %v213 = vadd.f32 0.0, %v212
    %v214 = vpop.f32.mrb[0].mxu0
    %v215 = vpop.f32.mrb[0].mxu0
    %v216 = vadd.f32 0.0, %v215
    %v217 = vpop.f32.mrb[0].mxu0
    %218 = vdwg.mxu0
    %v219 = vld [vmem:[%s2] sm:$0xff]
    %v220 = vld [vmem:[%s2 + $0x8] sm:$0xff]
    %v221 = vld [vmem:[%s2 + $0x10] sm:$0xff]
    %v222 = vld [vmem:[%s2 + $0x18] sm:$0xff]
    %224 = vset.pattern.permute.xlu0 0
    %225 = vperm.xlu0 %224, %v219
    %v226 = vpop.permute.xlu0 %225
    %229 = vset.pattern.permute.xlu0 0
    %230 = vperm.xlu0 %229, %v220
    %v231 = vpop.permute.xlu0 %230
    %234 = vset.pattern.permute.xlu0 0
    %235 = vperm.xlu0 %234, %v221
    %v236 = vpop.permute.xlu0 %235
    %239 = vset.pattern.permute.xlu0 0
    %240 = vperm.xlu0 %239, %v222
    %v241 = vpop.permute.xlu0 %240
    %v243 = vmul.f32 %v205, %v226
    %v244 = vmul.f32 %v208, %v231
    %v245 = vmul.f32 %v213, %v236
    %v246 = vmul.f32 %v216, %v241
    %v247 = vpack.c.bf16 %v244, %v243
    %v248 = vpack.c.bf16 %v246, %v245
    %v249 = vld [vmem:[%s3] sm:$0xf]
    %v250 = vld [vmem:[%s3 + $0x4] sm:$0xf]
    %v251 = vld [vmem:[%s3 + $0x8] sm:$0xf]
    %v252 = vld [vmem:[%s3 + $0xc] sm:$0xf]
    %v253 = vld [vmem:[%s3 + $0x10] sm:$0xf]
    %v254 = vld [vmem:[%s3 + $0x14] sm:$0xf]
    %v255 = vld [vmem:[%s3 + $0x18] sm:$0xf]
    %v256 = vld [vmem:[%s3 + $0x1c] sm:$0xf]
    %v257 = vld [vmem:[%s3 + $0x20] sm:$0xf]
    %v258 = vld [vmem:[%s3 + $0x24] sm:$0xf]
    %v259 = vld [vmem:[%s3 + $0x28] sm:$0xf]
    %v260 = vld [vmem:[%s3 + $0x2c] sm:$0xf]
    %v261 = vld [vmem:[%s3 + $0x30] sm:$0xf]
    %v262 = vld [vmem:[%s3 + $0x34] sm:$0xf]
    %v263 = vld [vmem:[%s3 + $0x38] sm:$0xf]
    %v264 = vld [vmem:[%s3 + $0x3c] sm:$0xf]
    %v265 = vld [vmem:[%s4] sm:$0x1]
    %v267 = vlaneseq
    %v268 = vshrl.u32 %v267, 7
    %v269 = vsub.s32 0, %v268
    %v270 = vrot.slane %v265, %v269
    %v288 = vunpack.c.l.b16 %v249
    %v289 = vunpack.c.l.b16 %v250
    %v290 = vunpack.c.l.b16 %v251
    %v291 = vunpack.c.l.b16 %v252
    %v292 = vunpack.c.l.b16 %v253
    %v293 = vunpack.c.l.b16 %v254
    %v294 = vunpack.c.l.b16 %v255
    %v295 = vunpack.c.l.b16 %v256
    %v296 = vunpack.c.l.b16 %v257
    %v297 = vunpack.c.l.b16 %v258
    %v298 = vunpack.c.l.b16 %v259
    %v299 = vunpack.c.l.b16 %v260
    %v300 = vunpack.c.l.b16 %v261
    %v301 = vunpack.c.l.b16 %v262
    %v302 = vunpack.c.l.b16 %v263
    %v303 = vunpack.c.l.b16 %v264
    %v304 = vpack.c.b16 %v289, %v288
    %v305 = vpack.c.b16 %v291, %v290
    %v306 = vpack.c.b16 %v293, %v292
    %v307 = vpack.c.b16 %v295, %v294
    %v308 = vpack.c.b16 %v297, %v296
    %v309 = vpack.c.b16 %v299, %v298
    %v310 = vpack.c.b16 %v301, %v300
    %v311 = vpack.c.b16 %v303, %v302
    %320 = vmatprep.subr.bf16.mxu0 0
    %321 = vmatpush1.bf16.msra.mxu0 %v304
    %322 = vmatprep.subr.bf16.mxu0 0
    %323 = vmatpush1.bf16.msra.mxu0 %v305
    %324 = vmatprep.subr.bf16.mxu0 0
    %325 = vmatpush1.bf16.msra.mxu0 %v306
    %326 = vmatprep.subr.bf16.mxu0 0
    %327 = vmatpush1.bf16.msra.mxu0 %v307
    %328 = vmatprep.subr.bf16.mxu0 0
    %329 = vmatpush1.bf16.msra.mxu0 %v308
    %330 = vmatprep.subr.bf16.mxu0 0
    %331 = vmatpush1.bf16.msra.mxu0 %v309
    %332 = vmatprep.subr.bf16.mxu0 0
    %333 = vmatpush1.bf16.msra.mxu0 %v310
    %334 = vmatprep.subr.bf16.mxu0 0
    %335 = vmatpush1.bf16.msra.mxu0 %v311
    %336 = vmatprep.subr.bf16.mxu0 0
    %337 = vmatpush1.bf16.msra.mxu0 0
    %338 = vmatprep.subr.bf16.mxu0 0
    %339 = vmatpush1.bf16.msra.mxu0 0
    %340 = vmatprep.subr.bf16.mxu0 0
    %341 = vmatpush1.bf16.msra.mxu0 0
    %342 = vmatprep.subr.bf16.mxu0 0
    %343 = vmatpush1.bf16.msra.mxu0 0
    %344 = vmatprep.subr.bf16.mxu0 0
    %345 = vmatpush1.bf16.msra.mxu0 0
    %346 = vmatprep.subr.bf16.mxu0 0
    %347 = vmatpush1.bf16.msra.mxu0 0
    %348 = vmatprep.subr.bf16.mxu0 0
    %349 = vmatpush1.bf16.msra.mxu0 0
    %350 = vmatprep.subr.bf16.mxu0 0
    %351 = vmatpush1.bf16.msra.mxu0 0
    %352 = vmatprep.mubr.bf16.mxu0 0
    %353 = vmatmul.mubr.bf16.gmra.mrb[0].mxu0 %v247
    %v354 = vpop.f32.mrb[0].mxu0
    %v355 = vadd.f32 %v270, %v354
    %v356 = vpop.f32.mrb[0].mxu0
    %v357 = vpop.f32.mrb[0].mxu0
    %v358 = vadd.f32 %v270, %v357
    %v359 = vpop.f32.mrb[0].mxu0
    %360 = vmatprep.mubr.bf16.mxu0 0
    %361 = vmatmul.mubr.bf16.gmra.mrb[0].mxu0 %v248
    %v362 = vpop.f32.mrb[0].mxu0
    %v363 = vadd.f32 %v270, %v362
    %v364 = vpop.f32.mrb[0].mxu0
    %v365 = vpop.f32.mrb[0].mxu0
    %v366 = vadd.f32 %v270, %v365
    %v367 = vpop.f32.mrb[0].mxu0
    %368 = vdwg.mxu0
    %v369 = vmax.f32 %v355, 0.0
    %v370 = vmax.f32 %v358, 0.0
    %v371 = vmax.f32 %v363, 0.0
    %v372 = vmax.f32 %v366, 0.0
    %v373 = vpack.c.bf16 %v370, %v369
    %v374 = vpack.c.bf16 %v372, %v371
    %v375 = vld [vmem:[%s5] sm:$0xf]
    %v376 = vld [vmem:[%s5 + $0x4] sm:$0xf]
    %v379 = vunpack.c.l.b16 %v375
    %v380 = vunpack.c.l.b16 %v376
    %v381 = vpack.c.b16 %v380, %v379
    %vm382 = vcmask 261120
    %v384 = vsel %vm382, %v381, 0
    %386 = vmatprep.subr.bf16.mxu0 0
    %387 = vmatpush1.bf16.msra.mxu0 %v373
    %388 = vmatprep.subr.bf16.mxu0 0
    %389 = vmatpush1.bf16.msra.mxu0 %v374
    %390 = vmatprep.subr.bf16.mxu0 0
    %391 = vmatpush1.bf16.msra.mxu0 0
    %392 = vmatprep.subr.bf16.mxu0 0
    %393 = vmatpush1.bf16.msra.mxu0 0
    %394 = vmatprep.subr.bf16.mxu0 0
    %395 = vmatpush1.bf16.msra.mxu0 0
    %396 = vmatprep.subr.bf16.mxu0 0
    %397 = vmatpush1.bf16.msra.mxu0 0
    %398 = vmatprep.subr.bf16.mxu0 0
    %399 = vmatpush1.bf16.msra.mxu0 0
    %400 = vmatprep.subr.bf16.mxu0 0
    %401 = vmatpush1.bf16.msra.mxu0 0
    %402 = vmatprep.subr.bf16.mxu0 0
    %403 = vmatpush1.bf16.msra.mxu0 0
    %404 = vmatprep.subr.bf16.mxu0 0
    %405 = vmatpush1.bf16.msra.mxu0 0
    %406 = vmatprep.subr.bf16.mxu0 0
    %407 = vmatpush1.bf16.msra.mxu0 0
    %408 = vmatprep.subr.bf16.mxu0 0
    %409 = vmatpush1.bf16.msra.mxu0 0
    %410 = vmatprep.subr.bf16.mxu0 0
    %411 = vmatpush1.bf16.msra.mxu0 0
    %412 = vmatprep.subr.bf16.mxu0 0
    %413 = vmatpush1.bf16.msra.mxu0 0
    %414 = vmatprep.subr.bf16.mxu0 0
    %415 = vmatpush1.bf16.msra.mxu0 0
    %416 = vmatprep.subr.bf16.mxu0 0
    %417 = vmatpush1.bf16.msra.mxu0 0
    %418 = vmatprep.mubr.bf16.mxu0 0
    %419 = vmatmul.mubr.bf16.gmra.mrb[0].mxu0 %v384
    %v420 = vpop.f32.mrb[0].mxu0
    %v421 = vadd.f32 0.0, %v420
    %v422 = vpop.f32.mrb[0].mxu0
    %v423 = vpop.f32.mrb[0].mxu0
    %v424 = vadd.f32 0.0, %v423
    %v425 = vpop.f32.mrb[0].mxu0
    %426 = vdwg.mxu0
    %v427 = vld [vmem:[%s6] sm:$0xff]
    %v428 = vld [vmem:[%s6 + $0x8] sm:$0xff]
    %430 = vset.pattern.permute.xlu0 0
    %431 = vperm.xlu0 %430, %v427
    %v432 = vpop.permute.xlu0 %431
    %435 = vset.pattern.permute.xlu0 0
    %436 = vperm.xlu0 %435, %v428
    %v437 = vpop.permute.xlu0 %436
    %v439 = vmul.f32 %v421, %v432
    %v440 = vmul.f32 %v424, %v437
    %v441 = vpack.c.bf16 %v440, %v439
    %v442 = vld [vmem:[#allocation7] sm:$0xf]
    %v443 = vld [vmem:[#allocation7 + $0x4] sm:$0xf]
    %v444 = vld [vmem:[#allocation7 + $0x8] sm:$0xf]
    %v445 = vld [vmem:[#allocation7 + $0xc] sm:$0xf]
    %v446 = vld [vmem:[#allocation7 + $0x10] sm:$0xf]
    %v447 = vld [vmem:[#allocation7 + $0x14] sm:$0xf]
    %v448 = vld [vmem:[#allocation7 + $0x18] sm:$0xf]
    %v449 = vld [vmem:[#allocation7 + $0x1c] sm:$0xf]
    %v450 = vld [vmem:[#allocation7 + $0x20] sm:$0xf]
    %v451 = vld [vmem:[#allocation7 + $0x24] sm:$0xf]
    %v452 = vld [vmem:[#allocation7 + $0x28] sm:$0xf]
    %v453 = vld [vmem:[#allocation7 + $0x2c] sm:$0xf]
    %v454 = vld [vmem:[#allocation7 + $0x30] sm:$0xf]
    %v455 = vld [vmem:[#allocation7 + $0x34] sm:$0xf]
    %v456 = vld [vmem:[#allocation7 + $0x38] sm:$0xf]
    %v457 = vld [vmem:[#allocation7 + $0x3c] sm:$0xf]
    %v458 = vld [vmem:[%s8] sm:$0x1]
    %v460 = vlaneseq
    %v461 = vshrl.u32 %v460, 7
    %v462 = vsub.s32 0, %v461
    %v463 = vrot.slane %v458, %v462
    %v481 = vunpack.c.l.b16 %v442
    %v482 = vunpack.c.l.b16 %v443
    %v483 = vunpack.c.l.b16 %v444
    %v484 = vunpack.c.l.b16 %v445
    %v485 = vunpack.c.l.b16 %v446
    %v486 = vunpack.c.l.b16 %v447
    %v487 = vunpack.c.l.b16 %v448
    %v488 = vunpack.c.l.b16 %v449
    %v489 = vunpack.c.l.b16 %v450
    %v490 = vunpack.c.l.b16 %v451
    %v491 = vunpack.c.l.b16 %v452
    %v492 = vunpack.c.l.b16 %v453
    %v493 = vunpack.c.l.b16 %v454
    %v494 = vunpack.c.l.b16 %v455
    %v495 = vunpack.c.l.b16 %v456
    %v496 = vunpack.c.l.b16 %v457
    %v497 = vpack.c.b16 %v482, %v481
    %v498 = vpack.c.b16 %v484, %v483
    %v499 = vpack.c.b16 %v486, %v485
    %v500 = vpack.c.b16 %v488, %v487
    %v501 = vpack.c.b16 %v490, %v489
    %v502 = vpack.c.b16 %v492, %v491
    %v503 = vpack.c.b16 %v494, %v493
    %v504 = vpack.c.b16 %v496, %v495
    %513 = vmatprep.subr.bf16.mxu0 0
    %514 = vmatpush1.bf16.msra.mxu0 %v497
    %515 = vmatprep.subr.bf16.mxu0 0
    %516 = vmatpush1.bf16.msra.mxu0 %v498
    %517 = vmatprep.subr.bf16.mxu0 0
    %518 = vmatpush1.bf16.msra.mxu0 %v499
    %519 = vmatprep.subr.bf16.mxu0 0
    %520 = vmatpush1.bf16.msra.mxu0 %v500
    %521 = vmatprep.subr.bf16.mxu0 0
    %522 = vmatpush1.bf16.msra.mxu0 %v501
    %523 = vmatprep.subr.bf16.mxu0 0
    %524 = vmatpush1.bf16.msra.mxu0 %v502
    %525 = vmatprep.subr.bf16.mxu0 0
    %526 = vmatpush1.bf16.msra.mxu0 %v503
    %527 = vmatprep.subr.bf16.mxu0 0
    %528 = vmatpush1.bf16.msra.mxu0 %v504
    %529 = vmatprep.subr.bf16.mxu0 0
    %530 = vmatpush1.bf16.msra.mxu0 0
    %531 = vmatprep.subr.bf16.mxu0 0
    %532 = vmatpush1.bf16.msra.mxu0 0
    %533 = vmatprep.subr.bf16.mxu0 0
    %534 = vmatpush1.bf16.msra.mxu0 0
    %535 = vmatprep.subr.bf16.mxu0 0
    %536 = vmatpush1.bf16.msra.mxu0 0
    %537 = vmatprep.subr.bf16.mxu0 0
    %538 = vmatpush1.bf16.msra.mxu0 0
    %539 = vmatprep.subr.bf16.mxu0 0
    %540 = vmatpush1.bf16.msra.mxu0 0
    %541 = vmatprep.subr.bf16.mxu0 0
    %542 = vmatpush1.bf16.msra.mxu0 0
    %543 = vmatprep.subr.bf16.mxu0 0
    %544 = vmatpush1.bf16.msra.mxu0 0
    %545 = vmatprep.mubr.bf16.mxu0 0
    %546 = vmatmul.mubr.bf16.gmra.mrb[0].mxu0 %v441
    %v547 = vpop.f32.mrb[0].mxu0
    %v548 = vadd.f32 %v463, %v547
    %v549 = vpop.f32.mrb[0].mxu0
    %v550 = vpop.f32.mrb[0].mxu0
    %v551 = vadd.f32 %v463, %v550
    %v552 = vpop.f32.mrb[0].mxu0
    %553 = vdwg.mxu0
    %v554 = vld [vmem:[%s9] sm:$0xf]
    %v555 = vld [vmem:[%s9 + $0x4] sm:$0xf]
    %v556 = vpack.c.bf16 %v551, %v548
    %v559 = vunpack.c.l.b16 %v554
    %v560 = vunpack.c.l.b16 %v555
    %v561 = vpack.c.b16 %v560, %v559
    %vm562 = vcmask 130048
    %v564 = vsel %vm562, %v561, 0
    %566 = vmatprep.subr.bf16.mxu0 0
    %567 = vmatpush1.bf16.msra.mxu0 %v556
    %568 = vmatprep.subr.bf16.mxu0 0
    %569 = vmatpush1.bf16.msra.mxu0 0
    %570 = vmatprep.subr.bf16.mxu0 0
    %571 = vmatpush1.bf16.msra.mxu0 0
    %572 = vmatprep.subr.bf16.mxu0 0
    %573 = vmatpush1.bf16.msra.mxu0 0
    %574 = vmatprep.subr.bf16.mxu0 0
    %575 = vmatpush1.bf16.msra.mxu0 0
    %576 = vmatprep.subr.bf16.mxu0 0
    %577 = vmatpush1.bf16.msra.mxu0 0
    %578 = vmatprep.subr.bf16.mxu0 0
    %579 = vmatpush1.bf16.msra.mxu0 0
    %580 = vmatprep.subr.bf16.mxu0 0
    %581 = vmatpush1.bf16.msra.mxu0 0
    %582 = vmatprep.subr.bf16.mxu0 0
    %583 = vmatpush1.bf16.msra.mxu0 0
    %584 = vmatprep.subr.bf16.mxu0 0
    %585 = vmatpush1.bf16.msra.mxu0 0
    %586 = vmatprep.subr.bf16.mxu0 0
    %587 = vmatpush1.bf16.msra.mxu0 0
    %588 = vmatprep.subr.bf16.mxu0 0
    %589 = vmatpush1.bf16.msra.mxu0 0
    %590 = vmatprep.subr.bf16.mxu0 0
    %591 = vmatpush1.bf16.msra.mxu0 0
    %592 = vmatprep.subr.bf16.mxu0 0
    %593 = vmatpush1.bf16.msra.mxu0 0
    %594 = vmatprep.subr.bf16.mxu0 0
    %595 = vmatpush1.bf16.msra.mxu0 0
    %596 = vmatprep.subr.bf16.mxu0 0
    %597 = vmatpush1.bf16.msra.mxu0 0
    %598 = vmatprep.mubr.bf16.mxu0 0
    %599 = vmatmul.mubr.bf16.gmra.mrb[0].mxu0 %v564
    %v600 = vpop.f32.mrb[0].mxu0
    %v601 = vadd.f32 0.0, %v600
    %v602 = vpop.f32.mrb[0].mxu0
    %v603 = vpop.f32.mrb[0].mxu0
    %v604 = vadd.f32 0.0, %v603
    %v605 = vpop.f32.mrb[0].mxu0
    %606 = vdwg.mxu0
    %v607 = vmax.f32 %v548, 0.0
    %v608 = vmax.f32 %v551, 0.0
    %v609 = vpack.c.bf16 %v608, %v607
    %610 = vmatprep.subr.bf16.mxu0 0
    %611 = vmatpush1.bf16.msra.mxu0 %v609
    %612 = vmatprep.subr.bf16.mxu0 0
    %613 = vmatpush1.bf16.msra.mxu0 0
    %614 = vmatprep.subr.bf16.mxu0 0
    %615 = vmatpush1.bf16.msra.mxu0 0
    %616 = vmatprep.subr.bf16.mxu0 0
    %617 = vmatpush1.bf16.msra.mxu0 0
    %618 = vmatprep.subr.bf16.mxu0 0
    %619 = vmatpush1.bf16.msra.mxu0 0
    %620 = vmatprep.subr.bf16.mxu0 0
    %621 = vmatpush1.bf16.msra.mxu0 0
    %622 = vmatprep.subr.bf16.mxu0 0
    %623 = vmatpush1.bf16.msra.mxu0 0
    %624 = vmatprep.subr.bf16.mxu0 0
    %625 = vmatpush1.bf16.msra.mxu0 0
    %626 = vmatprep.subr.bf16.mxu0 0
    %627 = vmatpush1.bf16.msra.mxu0 0
    %628 = vmatprep.subr.bf16.mxu0 0
    %629 = vmatpush1.bf16.msra.mxu0 0
    %630 = vmatprep.subr.bf16.mxu0 0
    %631 = vmatpush1.bf16.msra.mxu0 0
    %632 = vmatprep.subr.bf16.mxu0 0
    %633 = vmatpush1.bf16.msra.mxu0 0
    %634 = vmatprep.subr.bf16.mxu0 0
    %635 = vmatpush1.bf16.msra.mxu0 0
    %636 = vmatprep.subr.bf16.mxu0 0
    %637 = vmatpush1.bf16.msra.mxu0 0
    %638 = vmatprep.subr.bf16.mxu0 0
    %639 = vmatpush1.bf16.msra.mxu0 0
    %640 = vmatprep.subr.bf16.mxu0 0
    %641 = vmatpush1.bf16.msra.mxu0 0
    %642 = vmatprep.mubr.bf16.mxu0 0
    %643 = vmatmul.mubr.bf16.gmra.mrb[0].mxu0 %v564
    %v644 = vpop.f32.mrb[0].mxu0
    %v645 = vadd.f32 0.0, %v644
    %v646 = vpop.f32.mrb[0].mxu0
    %v647 = vpop.f32.mrb[0].mxu0
    %v648 = vadd.f32 0.0, %v647
    %v649 = vpop.f32.mrb[0].mxu0
    %650 = vdwg.mxu0
    %v651 = vpack.c.bf16 %v604, %v601
    %v652 = vld [vmem:[#allocation8] sm:$0xf]
    %v653 = vld [vmem:[#allocation8 + $0x4] sm:$0xf]
    %v654 = vld [vmem:[#allocation8 + $0x8] sm:$0xf]
    %v655 = vld [vmem:[#allocation8 + $0xc] sm:$0xf]
    %v656 = vld [vmem:[#allocation8 + $0x10] sm:$0xf]
    %v657 = vld [vmem:[#allocation8 + $0x14] sm:$0xf]
    %v658 = vld [vmem:[#allocation8 + $0x18] sm:$0xf]
    %v659 = vld [vmem:[#allocation8 + $0x1c] sm:$0xf]
    %v660 = vld [vmem:[#allocation8 + $0x20] sm:$0xf]
    %v661 = vld [vmem:[#allocation8 + $0x24] sm:$0xf]
    %v662 = vld [vmem:[#allocation8 + $0x28] sm:$0xf]
    %v663 = vld [vmem:[#allocation8 + $0x2c] sm:$0xf]
    %v664 = vld [vmem:[#allocation8 + $0x30] sm:$0xf]
    %v665 = vld [vmem:[#allocation8 + $0x34] sm:$0xf]
    %v666 = vld [vmem:[#allocation8 + $0x38] sm:$0xf]
    %v667 = vld [vmem:[#allocation8 + $0x3c] sm:$0xf]
    %v668 = vpack.c.bf16 %v648, %v645
    %v669 = vld [vmem:[#allocation10] sm:$0xf]
    %v670 = vld [vmem:[#allocation10 + $0x4] sm:$0xf]
    %v671 = vld [vmem:[#allocation10 + $0x8] sm:$0xf]
    %v672 = vld [vmem:[#allocation10 + $0xc] sm:$0xf]
    %v673 = vld [vmem:[#allocation10 + $0x10] sm:$0xf]
    %v674 = vld [vmem:[#allocation10 + $0x14] sm:$0xf]
    %v675 = vld [vmem:[#allocation10 + $0x18] sm:$0xf]
    %v676 = vld [vmem:[#allocation10 + $0x1c] sm:$0xf]
    %v677 = vld [vmem:[#allocation10 + $0x20] sm:$0xf]
    %v678 = vld [vmem:[#allocation10 + $0x24] sm:$0xf]
    %v679 = vld [vmem:[#allocation10 + $0x28] sm:$0xf]
    %v680 = vld [vmem:[#allocation10 + $0x2c] sm:$0xf]
    %v681 = vld [vmem:[#allocation10 + $0x30] sm:$0xf]
    %v682 = vld [vmem:[#allocation10 + $0x34] sm:$0xf]
    %v683 = vld [vmem:[#allocation10 + $0x38] sm:$0xf]
    %v684 = vld [vmem:[#allocation10 + $0x3c] sm:$0xf]
    %v701 = vunpack.c.l.b16 %v669
    %v702 = vunpack.c.l.b16 %v670
    %v703 = vunpack.c.l.b16 %v671
    %v704 = vunpack.c.l.b16 %v672
    %v705 = vunpack.c.l.b16 %v673
    %v706 = vunpack.c.l.b16 %v674
    %v707 = vunpack.c.l.b16 %v675
    %v708 = vunpack.c.l.b16 %v676
    %v709 = vunpack.c.l.b16 %v677
    %v710 = vunpack.c.l.b16 %v678
    %v711 = vunpack.c.l.b16 %v679
    %v712 = vunpack.c.l.b16 %v680
    %v713 = vunpack.c.l.b16 %v681
    %v714 = vunpack.c.l.b16 %v682
    %v715 = vunpack.c.l.b16 %v683
    %v716 = vunpack.c.l.b16 %v684
    %v717 = vpack.c.b16 %v702, %v701
    %v718 = vpack.c.b16 %v704, %v703
    %v719 = vpack.c.b16 %v706, %v705
    %v720 = vpack.c.b16 %v708, %v707
    %v721 = vpack.c.b16 %v710, %v709
    %v722 = vpack.c.b16 %v712, %v711
    %v723 = vpack.c.b16 %v714, %v713
    %v724 = vpack.c.b16 %v716, %v715
    %733 = vmatprep.subr.bf16.mxu0 0
    %734 = vmatpush1.bf16.msra.mxu0 %v717
    %735 = vmatprep.subr.bf16.mxu0 0
    %736 = vmatpush1.bf16.msra.mxu0 %v718
    %737 = vmatprep.subr.bf16.mxu0 0
    %738 = vmatpush1.bf16.msra.mxu0 %v719
    %739 = vmatprep.subr.bf16.mxu0 0
    %740 = vmatpush1.bf16.msra.mxu0 %v720
    %741 = vmatprep.subr.bf16.mxu0 0
    %742 = vmatpush1.bf16.msra.mxu0 %v721
    %743 = vmatprep.subr.bf16.mxu0 0
    %744 = vmatpush1.bf16.msra.mxu0 %v722
    %745 = vmatprep.subr.bf16.mxu0 0
    %746 = vmatpush1.bf16.msra.mxu0 %v723
    %747 = vmatprep.subr.bf16.mxu0 0
    %748 = vmatpush1.bf16.msra.mxu0 %v724
    %749 = vmatprep.subr.bf16.mxu0 0
    %750 = vmatpush1.bf16.msra.mxu0 0
    %751 = vmatprep.subr.bf16.mxu0 0
    %752 = vmatpush1.bf16.msra.mxu0 0
    %753 = vmatprep.subr.bf16.mxu0 0
    %754 = vmatpush1.bf16.msra.mxu0 0
    %755 = vmatprep.subr.bf16.mxu0 0
    %756 = vmatpush1.bf16.msra.mxu0 0
    %757 = vmatprep.subr.bf16.mxu0 0
    %758 = vmatpush1.bf16.msra.mxu0 0
    %759 = vmatprep.subr.bf16.mxu0 0
    %760 = vmatpush1.bf16.msra.mxu0 0
    %761 = vmatprep.subr.bf16.mxu0 0
    %762 = vmatpush1.bf16.msra.mxu0 0
    %763 = vmatprep.subr.bf16.mxu0 0
    %764 = vmatpush1.bf16.msra.mxu0 0
    %765 = vmatprep.mubr.bf16.mxu0 0
    %766 = vmatmul.mubr.bf16.gmra.mrb[0].mxu0 %v668
    %v767 = vpop.f32.mrb[0].mxu0
    %v768 = vadd.f32 0.0, %v767
    %v769 = vpop.f32.mrb[0].mxu0
    %v770 = vpop.f32.mrb[0].mxu0
    %v771 = vadd.f32 0.0, %v770
    %v772 = vpop.f32.mrb[0].mxu0
    %773 = vdwg.mxu0
    %v790 = vunpack.c.l.b16 %v652
    %v791 = vunpack.c.l.b16 %v653
    %v792 = vunpack.c.l.b16 %v654
    %v793 = vunpack.c.l.b16 %v655
    %v794 = vunpack.c.l.b16 %v656
    %v795 = vunpack.c.l.b16 %v657
    %v796 = vunpack.c.l.b16 %v658
    %v797 = vunpack.c.l.b16 %v659
    %v798 = vunpack.c.l.b16 %v660
    %v799 = vunpack.c.l.b16 %v661
    %v800 = vunpack.c.l.b16 %v662
    %v801 = vunpack.c.l.b16 %v663
    %v802 = vunpack.c.l.b16 %v664
    %v803 = vunpack.c.l.b16 %v665
    %v804 = vunpack.c.l.b16 %v666
    %v805 = vunpack.c.l.b16 %v667
    %v806 = vpack.c.b16 %v791, %v790
    %v807 = vpack.c.b16 %v793, %v792
    %v808 = vpack.c.b16 %v795, %v794
    %v809 = vpack.c.b16 %v797, %v796
    %v810 = vpack.c.b16 %v799, %v798
    %v811 = vpack.c.b16 %v801, %v800
    %v812 = vpack.c.b16 %v803, %v802
    %v813 = vpack.c.b16 %v805, %v804
    %822 = vmatprep.subr.bf16.mxu0 0
    %823 = vmatpush1.bf16.msra.mxu0 %v806
    %824 = vmatprep.subr.bf16.mxu0 0
    %825 = vmatpush1.bf16.msra.mxu0 %v807
    %826 = vmatprep.subr.bf16.mxu0 0
    %827 = vmatpush1.bf16.msra.mxu0 %v808
    %828 = vmatprep.subr.bf16.mxu0 0
    %829 = vmatpush1.bf16.msra.mxu0 %v809
    %830 = vmatprep.subr.bf16.mxu0 0
    %831 = vmatpush1.bf16.msra.mxu0 %v810
    %832 = vmatprep.subr.bf16.mxu0 0
    %833 = vmatpush1.bf16.msra.mxu0 %v811
    %834 = vmatprep.subr.bf16.mxu0 0
    %835 = vmatpush1.bf16.msra.mxu0 %v812
    %836 = vmatprep.subr.bf16.mxu0 0
    %837 = vmatpush1.bf16.msra.mxu0 %v813
    %838 = vmatprep.subr.bf16.mxu0 0
    %839 = vmatpush1.bf16.msra.mxu0 0
    %840 = vmatprep.subr.bf16.mxu0 0
    %841 = vmatpush1.bf16.msra.mxu0 0
    %842 = vmatprep.subr.bf16.mxu0 0
    %843 = vmatpush1.bf16.msra.mxu0 0
    %844 = vmatprep.subr.bf16.mxu0 0
    %845 = vmatpush1.bf16.msra.mxu0 0
    %846 = vmatprep.subr.bf16.mxu0 0
    %847 = vmatpush1.bf16.msra.mxu0 0
    %848 = vmatprep.subr.bf16.mxu0 0
    %849 = vmatpush1.bf16.msra.mxu0 0
    %850 = vmatprep.subr.bf16.mxu0 0
    %851 = vmatpush1.bf16.msra.mxu0 0
    %852 = vmatprep.subr.bf16.mxu0 0
    %853 = vmatpush1.bf16.msra.mxu0 0
    %854 = vmatprep.mubr.bf16.mxu0 0
    %855 = vmatmul.mubr.bf16.gmra.mrb[0].mxu0 %v651
    %v856 = vpop.f32.mrb[0].mxu0
    %v857 = vadd.f32 %v768, %v856
    %v858 = vpop.f32.mrb[0].mxu0
    %v859 = vpop.f32.mrb[0].mxu0
    %v860 = vadd.f32 %v771, %v859
    %v861 = vpop.f32.mrb[0].mxu0
    %862 = vdwg.mxu0
    %v863 = vld [vmem:[%s10] sm:$0xff]
    %v864 = vld [vmem:[%s10 + $0x8] sm:$0xff]
    %866 = vset.pattern.permute.xlu0 0
    %867 = vperm.xlu0 %866, %v863
    %v868 = vpop.permute.xlu0 %867
    %871 = vset.pattern.permute.xlu0 0
    %872 = vperm.xlu0 %871, %v864
    %v873 = vpop.permute.xlu0 %872
    %v875 = vmul.f32 %v857, %v868
    %v876 = vmul.f32 %v860, %v873
    %v877 = vld [vmem:[%s13] sm:$0x1]
    %v879 = vlaneseq
    %v880 = vshrl.u32 %v879, 7
    %v881 = vsub.s32 0, %v880
    %v882 = vrot.slane %v877, %v881
    %v884 = vadd.f32 %v875, %v882
    %v885 = vadd.f32 %v876, %v882
    %886 = vst [vmem:[#allocation11] sm:$0xff] %v884
    %887 = vst [vmem:[#allocation11 + $0x8] sm:$0xff] %v885
    // Predicated region
    $region78: #{tpu_custom_call.1} parent=1 // pred_check
      _
    $region79: #{tpu_custom_call.1} parent=1 // pred_check_branch
      %889 = sbr.rel (0) target = $region81
    $region80: #{tpu_custom_call.1} parent=1 // pred_region
      %s891 = ssub.s32 256, 256
      %892 = vsyncadd [#allocation4], %s891
      %s893 = sshll.u32 [#allocation11], 4
      %s894 = int_to_ptr.vmem [resolvable:$true] %s893
      %899 = dma.vmem_to_hbm [thread:$0]  %s894, 256, %s14, [#allocation4], 128, 128, 8
    $region81: #{tpu_custom_call.1} parent=1 // pred_fallthru
      _
    // Predicated region
    $region82: #{tpu_custom_call.1} parent=1 // pred_check
      _
    $region83: #{tpu_custom_call.1} parent=1 // pred_check_branch
      %901 = sbr.rel (0) target = $region85
    $region84: #{tpu_custom_call.1} parent=1 // pred_region
      %902 = dma.done [#allocation4], 256
    $region85: #{tpu_custom_call.1} parent=1 // pred_fallthru
      _
    %903 = vsyncpa [#allocation3], 1
    %904 = vsyncpa [#allocation6], 1
    %905 = vsyncpa [#allocation9], 1
    %906 = vsyncpa [#allocation4], 1

</llo_original>
